<compile_context>
chip_gen: v7x
topology: tpu7x:2x2x1
jax: 0.10.0
libtpu: 0.0.40
codegen_flags: <defaults>
</compile_context>

<pallas_src>
import functools

import jax
import jax.numpy as jnp
from jax.experimental import pallas as pl
from jax.experimental.pallas import tpu as pltpu

_LANE = 128  # TPU vreg lane width; last block dim kept a multiple of this.


def _round_up(n, m):
    return ((n + m - 1) // m) * m


def _pick_tile(mp, rows_total, *, tm_max=2048,
               vmem_budget=24 * 1024 * 1024, min_steps=2):
    """Largest multiple-of-128 divisor of `mp` that fits the VMEM budget and,
    when mp is large enough, leaves >= min_steps grid steps for 2-TC chips."""
    # Per-lane VMEM footprint: 2 (double-buffer) * 2 (re/im) * rows * 4 B.
    bytes_per_lane = 2 * 2 * rows_total * 4
    cap = max(_LANE, (vmem_budget // bytes_per_lane) // _LANE * _LANE)
    cap = min(cap, tm_max)
    k = mp // _LANE                      # mp is a multiple of 128 by construction
    best = _LANE
    for t in range(1, k + 1):
        if k % t != 0:
            continue
        tm = t * _LANE
        if tm > cap:
            break
        if k >= min_steps and (k // t) < min_steps:
            continue                     # keep >= min_steps parallel grid steps
        best = tm
    return best


def _spectral_mul_kernel(x_ref, w_ref, o_ref, *, batch, cin, cout):
    """Per-frequency complex channel contraction on the VPU.

    x_ref: [2, B*Cin,    TM]   row b*Cin + i   (axis 0 = real / imag)
    w_ref: [2, Cin*Cout, TM]   row i*Cout + o
    o_ref: [2, B*Cout,   TM]   row b*Cout + o

    out[b*Cout+o, m] = sum_i x[b*Cin+i, m] * w[i*Cout+o, m]   (complex)
    """
    acc_r = [None] * batch
    acc_i = [None] * batch
    for i in range(cin):
        # Weight rows for input channel i: contiguous Cout rows, shared by all b.
        wr_i = w_ref[0, pl.ds(i * cout, cout), :]        # [Cout, TM]
        wi_i = w_ref[1, pl.ds(i * cout, cout), :]
        for b in range(batch):
            # Materialize the x sublane-broadcast once per (i, b); both FMA
            # chains reuse the same vregs (JAX does not CSE broadcast_in_dim).
            xr_bi = jnp.broadcast_to(
                x_ref[0, pl.ds(b * cin + i, 1), :], wr_i.shape)
            xi_bi = jnp.broadcast_to(
                x_ref[1, pl.ds(b * cin + i, 1), :], wr_i.shape)
            dr = xr_bi * wr_i - xi_bi * wi_i
            di = xr_bi * wi_i + xi_bi * wr_i
            if acc_r[b] is None:
                acc_r[b], acc_i[b] = dr, di
            else:
                acc_r[b] = acc_r[b] + dr
                acc_i[b] = acc_i[b] + di
    # Single full-sublane store per part (unmasked vst on a [B*Cout, TM] slab).
    o_ref[0] = jnp.concatenate(acc_r, axis=0)
    o_ref[1] = jnp.concatenate(acc_i, axis=0)


def _spectral_mul(packed_x, packed_w, batch, cin, cout):
    """Packed complex contraction via a single Pallas launch.

    packed_x: [2, B*Cin,    Mp] float32
    packed_w: [2, Cin*Cout, Mp] float32
    returns:  [2, B*Cout,   Mp] float32  (padded lanes stay zero)
    """
    _, rx, mp = packed_x.shape
    rw = packed_w.shape[1]
    ro = batch * cout

    tm = _pick_tile(mp, rx + rw + ro)    # divides mp -> no per-call pad needed
    grid = (mp // tm,)

    kernel = functools.partial(_spectral_mul_kernel,
                               batch=batch, cin=cin, cout=cout)
    return pl.pallas_call(
        kernel,
        out_shape=jax.ShapeDtypeStruct((2, ro, mp), jnp.float32),
        grid_spec=pltpu.PrefetchScalarGridSpec(
            num_scalar_prefetch=0,
            grid=grid,
            in_specs=[
                pl.BlockSpec((2, rx, tm), lambda m: (0, 0, m)),
                pl.BlockSpec((2, rw, tm), lambda m: (0, 0, m)),
            ],
            out_specs=pl.BlockSpec((2, ro, tm), lambda m: (0, 0, m)),
        ),
        compiler_params=pltpu.CompilerParams(
            # Frequency blocks are independent -> lets v7x's 2 TCs split them.
            dimension_semantics=("parallel",),
            vmem_limit_bytes=32 * 1024 * 1024,
        ),
    )(packed_x, packed_w)


def prepare_spectral_weights(weights1, weights2):
    """One-time weight re-layout (hoisted out of the forward path).

    weights1/weights2: [Cin, Cout, m1, m2] complex64
    returns: [2, Cin*Cout, Mp] float32 with axis 0 = (real, imag); row index is
    i*Cout + o; the two weight blocks are concatenated along the flattened
    frequency (lane) axis and zero-padded to a multiple of 128 lanes.
    """
    cin, cout, m1, m2 = weights1.shape
    m = m1 * m2
    w = jnp.concatenate(
        [weights1.reshape(cin, cout, m), weights2.reshape(cin, cout, m)],
        axis=-1)                                           # [Cin, Cout, 2m]
    w = w.reshape(cin * cout, 2 * m)                       # row = i*Cout + o
    packed = jnp.stack([jnp.real(w), jnp.imag(w)], axis=0).astype(jnp.float32)
    mp = _round_up(2 * m, _LANE)
    if mp != 2 * m:
        packed = jnp.pad(packed, ((0, 0), (0, 0), (0, mp - 2 * m)))
    return packed                                          # [2, Cin*Cout, Mp]


@functools.partial(jax.jit, static_argnums=(2, 3))
def spectral_conv2d(x, packed_w, modes1, modes2):
    """Forward pass of SpectralConv2d. x: [B, Cin, H, W] float32 (NCHW)."""
    B, Cin, H, W = x.shape
    _, rw, Mp = packed_w.shape
    m = modes1 * modes2
    if Mp != _round_up(2 * m, _LANE):
        raise ValueError(
            f"packed_w lane dim {Mp} does not match modes "
            f"({modes1},{modes2}) -> expected {_round_up(2 * m, _LANE)}")
    if rw % Cin != 0:
        raise ValueError("packed_w row dim is not a multiple of Cin")
    Cout = rw // Cin
    Wf = W // 2 + 1

    # TODO(synk): rfft2/irfft2 have no Pallas equivalent; done in plain JAX.
    x_ft = jnp.fft.rfft2(x)                                # [B, Cin, H, Wf] c64

    # Gather both retained bands with one concat, collapse (B,Cin) and the
    # (mode1, mode2) axes so the kernel sees 8-sublane x 128-lane tiles.
    bands = jnp.concatenate(
        [x_ft[:, :, :modes1, :modes2], x_ft[:, :, H - modes1:, :modes2]],
        axis=2)                                            # [B, Cin, 2*m1, m2]
    xf = bands.reshape(B * Cin, 2 * m)                     # row = b*Cin + i
    packed_x = jnp.stack([jnp.real(xf), jnp.imag(xf)], axis=0).astype(jnp.float32)
    if Mp != 2 * m:
        packed_x = jnp.pad(packed_x, ((0, 0), (0, 0), (0, Mp - 2 * m)))

    out_packed = _spectral_mul(packed_x, packed_w, B, Cin, Cout)  # [2,B*Cout,Mp]

    out = out_packed[:, :, :2 * m].reshape(2, B, Cout, 2 * modes1, modes2)
    out_c = jax.lax.complex(out[0], out[1])                # [B,Cout,2*m1,m2] c64

    out_ft = jnp.zeros((B, Cout, H, Wf), dtype=jnp.complex64)
    out_ft = out_ft.at[:, :, :modes1, :modes2].set(out_c[:, :, :modes1, :])
    out_ft = out_ft.at[:, :, H - modes1:, :modes2].set(out_c[:, :, modes1:, :])
    return jnp.fft.irfft2(out_ft, s=(H, W)).astype(jnp.float32)


def _reference_spectral_conv2d(x, weights1, weights2, modes1, modes2):
    """Pure-JAX reference for verification (full f32-accurate contractions)."""
    B, Cin, H, W = x.shape
    Cout = weights1.shape[1]
    x_ft = jnp.fft.rfft2(x).astype(jnp.complex64)
    hi = jax.lax.Precision.HIGHEST
    out_ft = jnp.zeros((B, Cout, H, W // 2 + 1), dtype=jnp.complex64)
    out_ft = out_ft.at[:, :, :modes1, :modes2].set(
        jnp.einsum('bixy,ioxy->boxy', x_ft[:, :, :modes1, :modes2], weights1,
                   precision=hi))
    out_ft = out_ft.at[:, :, H - modes1:, :modes2].set(
        jnp.einsum('bixy,ioxy->boxy', x_ft[:, :, H - modes1:, :modes2], weights2,
                   precision=hi))
    return jnp.fft.irfft2(out_ft, s=(H, W)).astype(jnp.float32)


if __name__ == "__main__":
    # Small shapes consistent with the module.
    B, Cin, Cout = 2, 4, 4
    H = W = 16
    modes1 = modes2 = 4

    key = jax.random.PRNGKey(0)
    kx, kw1r, kw1i, kw2r, kw2i = jax.random.split(key, 5)

    x = jax.random.normal(kx, (B, Cin, H, W), dtype=jnp.float32)

    # Deterministic parameter init mirroring
    #   scale * torch.rand(Cin, Cout, m1, m2, dtype=torch.cfloat)
    scale = 1.0 / (Cin * Cout)
    wshape = (Cin, Cout, modes1, modes2)
    weights1 = (scale * jax.random.uniform(kw1r, wshape, dtype=jnp.float32)
                + 1j * scale * jax.random.uniform(kw1i, wshape, dtype=jnp.float32)
                ).astype(jnp.complex64)
    weights2 = (scale * jax.random.uniform(kw2r, wshape, dtype=jnp.float32)
                + 1j * scale * jax.random.uniform(kw2i, wshape, dtype=jnp.float32)
                ).astype(jnp.complex64)

    # One-time weight re-layout (hoisted out of the per-call forward path).
    packed_w = jax.block_until_ready(prepare_spectral_weights(weights1, weights2))

    out = spectral_conv2d(x, packed_w, modes1, modes2)
    out = jax.block_until_ready(out)

    ref = jax.block_until_ready(
        _reference_spectral_conv2d(x, weights1, weights2, modes1, modes2))

    assert out.shape == (B, Cout, H, W)
    assert out.dtype == jnp.float32
    assert jnp.allclose(out, ref, atol=1e-5, rtol=1e-5), "mismatch vs reference"

    print("KERNEL_OK")
</pallas_src>

<mosaic_0001>
module attributes {stable_mosaic.version = 11 : i64} {
  func.func @_spectral_mul_kernel(%arg0: i32, %arg1: memref<2x8x128xf32, #tpu.memory_space<vmem>>, %arg2: memref<2x16x128xf32, #tpu.memory_space<vmem>>, %arg3: memref<2x8x128xf32, #tpu.memory_space<vmem>>) attributes {dimension_semantics = [#tpu.dimension_semantics<parallel>], iteration_bounds = array<i64: 1>, scalar_prefetch = 0 : i64, scratch_operands = 0 : i64, tpu.core_type = #tpu.core_type<tc>, window_params = [{transform_indices = @transform_0, window_bounds = array<i64: 2, 8, 128>}, {transform_indices = @transform_1, window_bounds = array<i64: 2, 16, 128>}, {transform_indices = @transform_2, window_bounds = array<i64: 2, 8, 128>}]} {
    %c0 = arith.constant 0 : index
    %c0_0 = arith.constant 0 : index
    %c0_1 = arith.constant 0 : index
    %0 = vector.load %arg2[%c0, %c0_0, %c0_1] : memref<2x16x128xf32, #tpu.memory_space<vmem>>, vector<1x4x128xf32>
    %1 = vector.shape_cast %0 : vector<1x4x128xf32> to vector<4x128xf32>
    %c1 = arith.constant 1 : index
    %c0_2 = arith.constant 0 : index
    %c0_3 = arith.constant 0 : index
    %2 = vector.load %arg2[%c1, %c0_2, %c0_3] : memref<2x16x128xf32, #tpu.memory_space<vmem>>, vector<1x4x128xf32>
    %3 = vector.shape_cast %2 : vector<1x4x128xf32> to vector<4x128xf32>
    %c0_4 = arith.constant 0 : index
    %c0_5 = arith.constant 0 : index
    %c0_6 = arith.constant 0 : index
    %4 = vector.load %arg1[%c0_4, %c0_5, %c0_6] : memref<2x8x128xf32, #tpu.memory_space<vmem>>, vector<1x1x128xf32>
    %5 = vector.shape_cast %4 : vector<1x1x128xf32> to vector<1x128xf32>
    %6 = vector.shape_cast %5 : vector<1x128xf32> to vector<1x128xf32>
    %7 = vector.broadcast %6 : vector<1x128xf32> to vector<4x128xf32>
    %c1_7 = arith.constant 1 : index
    %c0_8 = arith.constant 0 : index
    %c0_9 = arith.constant 0 : index
    %8 = vector.load %arg1[%c1_7, %c0_8, %c0_9] : memref<2x8x128xf32, #tpu.memory_space<vmem>>, vector<1x1x128xf32>
    %9 = vector.shape_cast %8 : vector<1x1x128xf32> to vector<1x128xf32>
    %10 = vector.shape_cast %9 : vector<1x128xf32> to vector<1x128xf32>
    %11 = vector.broadcast %10 : vector<1x128xf32> to vector<4x128xf32>
    %12 = arith.mulf %7, %1 : vector<4x128xf32>
    %13 = arith.mulf %11, %3 : vector<4x128xf32>
    %14 = arith.subf %12, %13 : vector<4x128xf32>
    %15 = arith.mulf %7, %3 : vector<4x128xf32>
    %16 = arith.mulf %11, %1 : vector<4x128xf32>
    %17 = arith.addf %15, %16 : vector<4x128xf32>
    %c0_10 = arith.constant 0 : index
    %c4 = arith.constant 4 : index
    %c0_11 = arith.constant 0 : index
    %18 = vector.load %arg1[%c0_10, %c4, %c0_11] : memref<2x8x128xf32, #tpu.memory_space<vmem>>, vector<1x1x128xf32>
    %19 = vector.shape_cast %18 : vector<1x1x128xf32> to vector<1x128xf32>
    %20 = vector.shape_cast %19 : vector<1x128xf32> to vector<1x128xf32>
    %21 = vector.broadcast %20 : vector<1x128xf32> to vector<4x128xf32>
    %c1_12 = arith.constant 1 : index
    %c4_13 = arith.constant 4 : index
    %c0_14 = arith.constant 0 : index
    %22 = vector.load %arg1[%c1_12, %c4_13, %c0_14] : memref<2x8x128xf32, #tpu.memory_space<vmem>>, vector<1x1x128xf32>
    %23 = vector.shape_cast %22 : vector<1x1x128xf32> to vector<1x128xf32>
    %24 = vector.shape_cast %23 : vector<1x128xf32> to vector<1x128xf32>
    %25 = vector.broadcast %24 : vector<1x128xf32> to vector<4x128xf32>
    %26 = arith.mulf %21, %1 : vector<4x128xf32>
    %27 = arith.mulf %25, %3 : vector<4x128xf32>
    %28 = arith.subf %26, %27 : vector<4x128xf32>
    %29 = arith.mulf %21, %3 : vector<4x128xf32>
    %30 = arith.mulf %25, %1 : vector<4x128xf32>
    %31 = arith.addf %29, %30 : vector<4x128xf32>
    %c0_15 = arith.constant 0 : index
    %c4_16 = arith.constant 4 : index
    %c0_17 = arith.constant 0 : index
    %32 = vector.load %arg2[%c0_15, %c4_16, %c0_17] : memref<2x16x128xf32, #tpu.memory_space<vmem>>, vector<1x4x128xf32>
    %33 = vector.shape_cast %32 : vector<1x4x128xf32> to vector<4x128xf32>
    %c1_18 = arith.constant 1 : index
    %c4_19 = arith.constant 4 : index
    %c0_20 = arith.constant 0 : index
    %34 = vector.load %arg2[%c1_18, %c4_19, %c0_20] : memref<2x16x128xf32, #tpu.memory_space<vmem>>, vector<1x4x128xf32>
    %35 = vector.shape_cast %34 : vector<1x4x128xf32> to vector<4x128xf32>
    %c0_21 = arith.constant 0 : index
    %c1_22 = arith.constant 1 : index
    %c0_23 = arith.constant 0 : index
    %36 = vector.load %arg1[%c0_21, %c1_22, %c0_23] : memref<2x8x128xf32, #tpu.memory_space<vmem>>, vector<1x1x128xf32>
    %37 = vector.shape_cast %36 : vector<1x1x128xf32> to vector<1x128xf32>
    %38 = vector.shape_cast %37 : vector<1x128xf32> to vector<1x128xf32>
    %39 = vector.broadcast %38 : vector<1x128xf32> to vector<4x128xf32>
    %c1_24 = arith.constant 1 : index
    %c1_25 = arith.constant 1 : index
    %c0_26 = arith.constant 0 : index
    %40 = vector.load %arg1[%c1_24, %c1_25, %c0_26] : memref<2x8x128xf32, #tpu.memory_space<vmem>>, vector<1x1x128xf32>
    %41 = vector.shape_cast %40 : vector<1x1x128xf32> to vector<1x128xf32>
    %42 = vector.shape_cast %41 : vector<1x128xf32> to vector<1x128xf32>
    %43 = vector.broadcast %42 : vector<1x128xf32> to vector<4x128xf32>
    %44 = arith.mulf %39, %33 : vector<4x128xf32>
    %45 = arith.mulf %43, %35 : vector<4x128xf32>
    %46 = arith.subf %44, %45 : vector<4x128xf32>
    %47 = arith.mulf %39, %35 : vector<4x128xf32>
    %48 = arith.mulf %43, %33 : vector<4x128xf32>
    %49 = arith.addf %47, %48 : vector<4x128xf32>
    %50 = arith.addf %14, %46 : vector<4x128xf32>
    %51 = arith.addf %17, %49 : vector<4x128xf32>
    %c0_27 = arith.constant 0 : index
    %c5 = arith.constant 5 : index
    %c0_28 = arith.constant 0 : index
    %52 = vector.load %arg1[%c0_27, %c5, %c0_28] : memref<2x8x128xf32, #tpu.memory_space<vmem>>, vector<1x1x128xf32>
    %53 = vector.shape_cast %52 : vector<1x1x128xf32> to vector<1x128xf32>
    %54 = vector.shape_cast %53 : vector<1x128xf32> to vector<1x128xf32>
    %55 = vector.broadcast %54 : vector<1x128xf32> to vector<4x128xf32>
    %c1_29 = arith.constant 1 : index
    %c5_30 = arith.constant 5 : index
    %c0_31 = arith.constant 0 : index
    %56 = vector.load %arg1[%c1_29, %c5_30, %c0_31] : memref<2x8x128xf32, #tpu.memory_space<vmem>>, vector<1x1x128xf32>
    %57 = vector.shape_cast %56 : vector<1x1x128xf32> to vector<1x128xf32>
    %58 = vector.shape_cast %57 : vector<1x128xf32> to vector<1x128xf32>
    %59 = vector.broadcast %58 : vector<1x128xf32> to vector<4x128xf32>
    %60 = arith.mulf %55, %33 : vector<4x128xf32>
    %61 = arith.mulf %59, %35 : vector<4x128xf32>
    %62 = arith.subf %60, %61 : vector<4x128xf32>
    %63 = arith.mulf %55, %35 : vector<4x128xf32>
    %64 = arith.mulf %59, %33 : vector<4x128xf32>
    %65 = arith.addf %63, %64 : vector<4x128xf32>
    %66 = arith.addf %28, %62 : vector<4x128xf32>
    %67 = arith.addf %31, %65 : vector<4x128xf32>
    %c0_32 = arith.constant 0 : index
    %c8 = arith.constant 8 : index
    %c0_33 = arith.constant 0 : index
    %68 = vector.load %arg2[%c0_32, %c8, %c0_33] : memref<2x16x128xf32, #tpu.memory_space<vmem>>, vector<1x4x128xf32>
    %69 = vector.shape_cast %68 : vector<1x4x128xf32> to vector<4x128xf32>
    %c1_34 = arith.constant 1 : index
    %c8_35 = arith.constant 8 : index
    %c0_36 = arith.constant 0 : index
    %70 = vector.load %arg2[%c1_34, %c8_35, %c0_36] : memref<2x16x128xf32, #tpu.memory_space<vmem>>, vector<1x4x128xf32>
    %71 = vector.shape_cast %70 : vector<1x4x128xf32> to vector<4x128xf32>
    %c0_37 = arith.constant 0 : index
    %c2 = arith.constant 2 : index
    %c0_38 = arith.constant 0 : index
    %72 = vector.load %arg1[%c0_37, %c2, %c0_38] : memref<2x8x128xf32, #tpu.memory_space<vmem>>, vector<1x1x128xf32>
    %73 = vector.shape_cast %72 : vector<1x1x128xf32> to vector<1x128xf32>
    %74 = vector.shape_cast %73 : vector<1x128xf32> to vector<1x128xf32>
    %75 = vector.broadcast %74 : vector<1x128xf32> to vector<4x128xf32>
    %c1_39 = arith.constant 1 : index
    %c2_40 = arith.constant 2 : index
    %c0_41 = arith.constant 0 : index
    %76 = vector.load %arg1[%c1_39, %c2_40, %c0_41] : memref<2x8x128xf32, #tpu.memory_space<vmem>>, vector<1x1x128xf32>
    %77 = vector.shape_cast %76 : vector<1x1x128xf32> to vector<1x128xf32>
    %78 = vector.shape_cast %77 : vector<1x128xf32> to vector<1x128xf32>
    %79 = vector.broadcast %78 : vector<1x128xf32> to vector<4x128xf32>
    %80 = arith.mulf %75, %69 : vector<4x128xf32>
    %81 = arith.mulf %79, %71 : vector<4x128xf32>
    %82 = arith.subf %80, %81 : vector<4x128xf32>
    %83 = arith.mulf %75, %71 : vector<4x128xf32>
    %84 = arith.mulf %79, %69 : vector<4x128xf32>
    %85 = arith.addf %83, %84 : vector<4x128xf32>
    %86 = arith.addf %50, %82 : vector<4x128xf32>
    %87 = arith.addf %51, %85 : vector<4x128xf32>
    %c0_42 = arith.constant 0 : index
    %c6 = arith.constant 6 : index
    %c0_43 = arith.constant 0 : index
    %88 = vector.load %arg1[%c0_42, %c6, %c0_43] : memref<2x8x128xf32, #tpu.memory_space<vmem>>, vector<1x1x128xf32>
    %89 = vector.shape_cast %88 : vector<1x1x128xf32> to vector<1x128xf32>
    %90 = vector.shape_cast %89 : vector<1x128xf32> to vector<1x128xf32>
    %91 = vector.broadcast %90 : vector<1x128xf32> to vector<4x128xf32>
    %c1_44 = arith.constant 1 : index
    %c6_45 = arith.constant 6 : index
    %c0_46 = arith.constant 0 : index
    %92 = vector.load %arg1[%c1_44, %c6_45, %c0_46] : memref<2x8x128xf32, #tpu.memory_space<vmem>>, vector<1x1x128xf32>
    %93 = vector.shape_cast %92 : vector<1x1x128xf32> to vector<1x128xf32>
    %94 = vector.shape_cast %93 : vector<1x128xf32> to vector<1x128xf32>
    %95 = vector.broadcast %94 : vector<1x128xf32> to vector<4x128xf32>
    %96 = arith.mulf %91, %69 : vector<4x128xf32>
    %97 = arith.mulf %95, %71 : vector<4x128xf32>
    %98 = arith.subf %96, %97 : vector<4x128xf32>
    %99 = arith.mulf %91, %71 : vector<4x128xf32>
    %100 = arith.mulf %95, %69 : vector<4x128xf32>
    %101 = arith.addf %99, %100 : vector<4x128xf32>
    %102 = arith.addf %66, %98 : vector<4x128xf32>
    %103 = arith.addf %67, %101 : vector<4x128xf32>
    %c0_47 = arith.constant 0 : index
    %c12 = arith.constant 12 : index
    %c0_48 = arith.constant 0 : index
    %104 = vector.load %arg2[%c0_47, %c12, %c0_48] : memref<2x16x128xf32, #tpu.memory_space<vmem>>, vector<1x4x128xf32>
    %105 = vector.shape_cast %104 : vector<1x4x128xf32> to vector<4x128xf32>
    %c1_49 = arith.constant 1 : index
    %c12_50 = arith.constant 12 : index
    %c0_51 = arith.constant 0 : index
    %106 = vector.load %arg2[%c1_49, %c12_50, %c0_51] : memref<2x16x128xf32, #tpu.memory_space<vmem>>, vector<1x4x128xf32>
    %107 = vector.shape_cast %106 : vector<1x4x128xf32> to vector<4x128xf32>
    %c0_52 = arith.constant 0 : index
    %c3 = arith.constant 3 : index
    %c0_53 = arith.constant 0 : index
    %108 = vector.load %arg1[%c0_52, %c3, %c0_53] : memref<2x8x128xf32, #tpu.memory_space<vmem>>, vector<1x1x128xf32>
    %109 = vector.shape_cast %108 : vector<1x1x128xf32> to vector<1x128xf32>
    %110 = vector.shape_cast %109 : vector<1x128xf32> to vector<1x128xf32>
    %111 = vector.broadcast %110 : vector<1x128xf32> to vector<4x128xf32>
    %c1_54 = arith.constant 1 : index
    %c3_55 = arith.constant 3 : index
    %c0_56 = arith.constant 0 : index
    %112 = vector.load %arg1[%c1_54, %c3_55, %c0_56] : memref<2x8x128xf32, #tpu.memory_space<vmem>>, vector<1x1x128xf32>
    %113 = vector.shape_cast %112 : vector<1x1x128xf32> to vector<1x128xf32>
    %114 = vector.shape_cast %113 : vector<1x128xf32> to vector<1x128xf32>
    %115 = vector.broadcast %114 : vector<1x128xf32> to vector<4x128xf32>
    %116 = arith.mulf %111, %105 : vector<4x128xf32>
    %117 = arith.mulf %115, %107 : vector<4x128xf32>
    %118 = arith.subf %116, %117 : vector<4x128xf32>
    %119 = arith.mulf %111, %107 : vector<4x128xf32>
    %120 = arith.mulf %115, %105 : vector<4x128xf32>
    %121 = arith.addf %119, %120 : vector<4x128xf32>
    %122 = arith.addf %86, %118 : vector<4x128xf32>
    %123 = arith.addf %87, %121 : vector<4x128xf32>
    %c0_57 = arith.constant 0 : index
    %c7 = arith.constant 7 : index
    %c0_58 = arith.constant 0 : index
    %124 = vector.load %arg1[%c0_57, %c7, %c0_58] : memref<2x8x128xf32, #tpu.memory_space<vmem>>, vector<1x1x128xf32>
    %125 = vector.shape_cast %124 : vector<1x1x128xf32> to vector<1x128xf32>
    %126 = vector.shape_cast %125 : vector<1x128xf32> to vector<1x128xf32>
    %127 = vector.broadcast %126 : vector<1x128xf32> to vector<4x128xf32>
    %c1_59 = arith.constant 1 : index
    %c7_60 = arith.constant 7 : index
    %c0_61 = arith.constant 0 : index
    %128 = vector.load %arg1[%c1_59, %c7_60, %c0_61] : memref<2x8x128xf32, #tpu.memory_space<vmem>>, vector<1x1x128xf32>
    %129 = vector.shape_cast %128 : vector<1x1x128xf32> to vector<1x128xf32>
    %130 = vector.shape_cast %129 : vector<1x128xf32> to vector<1x128xf32>
    %131 = vector.broadcast %130 : vector<1x128xf32> to vector<4x128xf32>
    %132 = arith.mulf %127, %105 : vector<4x128xf32>
    %133 = arith.mulf %131, %107 : vector<4x128xf32>
    %134 = arith.subf %132, %133 : vector<4x128xf32>
    %135 = arith.mulf %127, %107 : vector<4x128xf32>
    %136 = arith.mulf %131, %105 : vector<4x128xf32>
    %137 = arith.addf %135, %136 : vector<4x128xf32>
    %138 = arith.addf %102, %134 : vector<4x128xf32>
    %139 = arith.addf %103, %137 : vector<4x128xf32>
    %140 = tpu.concatenate %122, %138 in 0 : vector<4x128xf32>, vector<4x128xf32> -> vector<8x128xf32>
    %c0_62 = arith.constant 0 : index
    %c0_63 = arith.constant 0 : index
    %c0_64 = arith.constant 0 : index
    %141 = vector.load %arg3[%c0_62, %c0_63, %c0_64] : memref<2x8x128xf32, #tpu.memory_space<vmem>>, vector<1x8x128xf32>
    %142 = vector.shape_cast %141 : vector<1x8x128xf32> to vector<8x128xf32>
    %143 = vector.shape_cast %140 : vector<8x128xf32> to vector<1x8x128xf32>
    tpu.vector_store %arg3[%c0_62, %c0_63, %c0_64], %143 {strides = array<i32>} : memref<2x8x128xf32, #tpu.memory_space<vmem>>, vector<1x8x128xf32>,
    %144 = tpu.concatenate %123, %139 in 0 : vector<4x128xf32>, vector<4x128xf32> -> vector<8x128xf32>
    %c1_65 = arith.constant 1 : index
    %c0_66 = arith.constant 0 : index
    %c0_67 = arith.constant 0 : index
    %145 = vector.load %arg3[%c1_65, %c0_66, %c0_67] : memref<2x8x128xf32, #tpu.memory_space<vmem>>, vector<1x8x128xf32>
    %146 = vector.shape_cast %145 : vector<1x8x128xf32> to vector<8x128xf32>
    %147 = vector.shape_cast %144 : vector<8x128xf32> to vector<1x8x128xf32>
    tpu.vector_store %arg3[%c1_65, %c0_66, %c0_67], %147 {strides = array<i32>} : memref<2x8x128xf32, #tpu.memory_space<vmem>>, vector<1x8x128xf32>,
    return
  }
  func.func @transform_0(%arg0: i32) -> (i32, i32, i32) {
    %c0_i32 = arith.constant 0 : i32
    %c0_i32_0 = arith.constant 0 : i32
    %c0_i32_1 = arith.constant 0 : i32
    return %c0_i32, %c0_i32_0, %arg0 : i32, i32, i32
  }
  func.func @transform_1(%arg0: i32) -> (i32, i32, i32) {
    %c0_i32 = arith.constant 0 : i32
    %c0_i32_0 = arith.constant 0 : i32
    %c0_i32_1 = arith.constant 0 : i32
    return %c0_i32, %c0_i32_0, %arg0 : i32, i32, i32
  }
  func.func @transform_2(%arg0: i32) -> (i32, i32, i32) {
    %c0_i32 = arith.constant 0 : i32
    %c0_i32_0 = arith.constant 0 : i32
    %c0_i32_1 = arith.constant 0 : i32
    return %c0_i32, %c0_i32_0, %arg0 : i32, i32, i32
  }
}

</mosaic_0001>

<llo_original>
// kernel: squeeze.2
$region0: #{squeeze.2}
  %s0 = inlined_call_operand.vmem [shape: f32[1,8,32], index: 0, kind: input, shape index: {}]
  %s1 = inlined_call_operand.vmem [shape: f32[2,4,8,4], index: 1, kind: output, shape index: {}]
  %v2 = vld [vmem:[%s0] sm:$0xff]
  %vm3 = vcmask 31744
  %4 = vst.msk [vmem:[%s1] ss:$8 sm:$0xf] %vm3, %v2
  %5 = vst.msk [vmem:[%s1] ss:$8 sm:$0xf0] %vm3, %v2
  %v6 = vld [vmem:[%s0] sm:$0xff]
  %7 = vrot.lane.b32.xlu0 %v6, 124
  %v8 = vpop.permute.xlu0 %7
  %vm9 = vcmask 31744
  %s10 = scalar_lea.vmem %s1, 1
  %11 = vst.msk [vmem:[%s10] ss:$8 sm:$0xf] %vm9, %v8
  %s12 = scalar_lea.vmem %s1, 1
  %13 = vst.msk [vmem:[%s12] ss:$8 sm:$0xf0] %vm9, %v8
  %v14 = vld [vmem:[%s0] sm:$0xff]
  %15 = vrot.lane.b32.xlu0 %v14, 120
  %v16 = vpop.permute.xlu0 %15
  %vm17 = vcmask 31744
  %s18 = scalar_lea.vmem %s1, 2
  %19 = vst.msk [vmem:[%s18] ss:$8 sm:$0xf] %vm17, %v16
  %s20 = scalar_lea.vmem %s1, 2
  %21 = vst.msk [vmem:[%s20] ss:$8 sm:$0xf0] %vm17, %v16
  %v22 = vld [vmem:[%s0] sm:$0xff]
  %23 = vrot.lane.b32.xlu0 %v22, 116
  %v24 = vpop.permute.xlu0 %23
  %vm25 = vcmask 31744
  %s26 = scalar_lea.vmem %s1, 3
  %27 = vst.msk [vmem:[%s26] ss:$8 sm:$0xf] %vm25, %v24
  %s28 = scalar_lea.vmem %s1, 3
  %29 = vst.msk [vmem:[%s28] ss:$8 sm:$0xf0] %vm25, %v24
  %v30 = vld [vmem:[%s0] sm:$0xff]
  %31 = vrot.lane.b32.xlu0 %v30, 112
  %v32 = vpop.permute.xlu0 %31
  %vm33 = vcmask 31744
  %s34 = scalar_lea.vmem %s1, 4
  %35 = vst.msk [vmem:[%s34] ss:$8 sm:$0xf] %vm33, %v32
  %s36 = scalar_lea.vmem %s1, 4
  %37 = vst.msk [vmem:[%s36] ss:$8 sm:$0xf0] %vm33, %v32
  %v38 = vld [vmem:[%s0] sm:$0xff]
  %39 = vrot.lane.b32.xlu0 %v38, 108
  %v40 = vpop.permute.xlu0 %39
  %vm41 = vcmask 31744
  %s42 = scalar_lea.vmem %s1, 5
  %43 = vst.msk [vmem:[%s42] ss:$8 sm:$0xf] %vm41, %v40
  %s44 = scalar_lea.vmem %s1, 5
  %45 = vst.msk [vmem:[%s44] ss:$8 sm:$0xf0] %vm41, %v40
  %v46 = vld [vmem:[%s0] sm:$0xff]
  %47 = vrot.lane.b32.xlu0 %v46, 104
  %v48 = vpop.permute.xlu0 %47
  %vm49 = vcmask 31744
  %s50 = scalar_lea.vmem %s1, 6
  %51 = vst.msk [vmem:[%s50] ss:$8 sm:$0xf] %vm49, %v48
  %s52 = scalar_lea.vmem %s1, 6
  %53 = vst.msk [vmem:[%s52] ss:$8 sm:$0xf0] %vm49, %v48
  %v54 = vld [vmem:[%s0] sm:$0xff]
  %55 = vrot.lane.b32.xlu0 %v54, 100
  %v56 = vpop.permute.xlu0 %55
  %vm57 = vcmask 31744
  %s58 = scalar_lea.vmem %s1, 7
  %59 = vst.msk [vmem:[%s58] ss:$8 sm:$0xf] %vm57, %v56
  %s60 = scalar_lea.vmem %s1, 7
  %61 = vst.msk [vmem:[%s60] ss:$8 sm:$0xf0] %vm57, %v56

// kernel: reverse.1
$region0: #{reverse.1}
  %s0 = inlined_call_operand.vmem [shape: f32[2,4,16,7], index: 0, kind: input, shape index: {}]
  %s1 = inlined_call_operand.vmem [shape: f32[2,4,16,7], index: 1, kind: output, shape index: {}]
  $region1: #{reverse.1} parent=0
    #allocation0 [shape = 'u8[65536]{0}', space=vmem, size = 0x10000, scoped, tag = 'operand span for operand 0']
    #allocation1 [shape = 'u8[32768]{0}', space=vmem, size = 0x8000, scoped, tag = 'operand span for operand 1']
    %s2 = scalar_lea.vmem [#allocation0], 8
    // Predicated region
    $region2: #{reverse.1} parent=1 // pred_check
      _
    $region3: #{reverse.1} parent=1 // pred_check_branch
      %4 = sbr.rel (0) target = $region5
    $region4: #{reverse.1} parent=1 // pred_region
      // Predicated region
      $region6: #{reverse.1} parent=4 // pred_check
        _
      $region7: #{reverse.1} parent=4 // pred_check_branch
        %6 = sbr.rel (0) target = $region9
      $region8: #{reverse.1} parent=4 // pred_region
        // Predicated region
        $region21: #{reverse.1} parent=8 // pred_check
          _
        $region22: #{reverse.1} parent=8 // pred_check_branch
          %35 = sbr.rel (0) target = $region24
        $region23: #{reverse.1} parent=8 // pred_region
          loop: start=0, step=1, limit=1
          $region25: #{reverse.1} parent=23 // loop_pre_header
            _
          $region26: #{reverse.1} parent=23 // loop_header
            %s37 = sphi 0, %s41
            %p38 = scmp.ge.s32.totalorder %s37, 1
            %s42 = sphi %s0, %s0
            %s43 = sphi %s2, %s2
          $region27: #{reverse.1} parent=23 // loop_header_branch
            %40 = sbr.rel (%p38) target = $region31
          $region28: #{reverse.1} parent=23 // loop_body
            %v44 = vld [vmem:[%s42] sm:$0xff]
            %45 = vst [vmem:[%s43] sm:$0xff] %v44
            %v46 = vld [vmem:[%s42 + $0x8] sm:$0xff]
            %47 = vst [vmem:[%s43 + $0x10] sm:$0xff] %v46
            %v48 = vld [vmem:[%s42 + $0x10] sm:$0xff]
            %49 = vst [vmem:[%s43 + $0x20] sm:$0xff] %v48
            %v50 = vld [vmem:[%s42 + $0x18] sm:$0xff]
            %51 = vst [vmem:[%s43 + $0x30] sm:$0xff] %v50
            %v52 = vld [vmem:[%s42 + $0x20] sm:$0xff]
            %53 = vst [vmem:[%s43 + $0x40] sm:$0xff] %v52
            %v54 = vld [vmem:[%s42 + $0x28] sm:$0xff]
            %55 = vst [vmem:[%s43 + $0x50] sm:$0xff] %v54
            %v56 = vld [vmem:[%s42 + $0x30] sm:$0xff]
            %57 = vst [vmem:[%s43 + $0x60] sm:$0xff] %v56
            %v58 = vld [vmem:[%s42 + $0x38] sm:$0xff]
            %59 = vst [vmem:[%s43 + $0x70] sm:$0xff] %v58
          $region29: #{reverse.1} parent=23 // loop_footer
            %s41 = sadd.s32 1, %s37
          $region30: #{reverse.1} parent=23 // loop_footer_branch
            %36 = sbr.rel target = $region26
          $region31: #{reverse.1} parent=23 // loop_exit
            _
        $region24: #{reverse.1} parent=8 // pred_fallthru
          _
        // Predicated region
        $region32: #{reverse.1} parent=8 // pred_check
          _
        $region33: #{reverse.1} parent=8 // pred_check_branch
          %61 = sbr.rel target = $region35
        $region34: #{reverse.1} parent=8 // pred_region
          _
        $region35: #{reverse.1} parent=8 // pred_fallthru
          _
      $region9: #{reverse.1} parent=4 // pred_fallthru
        _
      // Predicated region
      $region10: #{reverse.1} parent=4 // pred_check
        _
      $region11: #{reverse.1} parent=4 // pred_check_branch
        %8 = sbr.rel target = $region13
      $region12: #{reverse.1} parent=4 // pred_region
        loop: start=0, step=1, limit=1
        $region14: #{reverse.1} parent=12 // loop_pre_header
          _
        $region15: #{reverse.1} parent=12 // loop_header
          %s11 = sphi 0, %s15
          %p12 = scmp.ge.s32.totalorder %s11, 1
          %s16 = sphi %s0, %s0
          %s17 = sphi %s2, %s2
        $region16: #{reverse.1} parent=12 // loop_header_branch
          %14 = sbr.rel (%p12) target = $region20
        $region17: #{reverse.1} parent=12 // loop_body
          %v18 = vld [vmem:[%s16] sm:$0xff]
          %19 = vst [vmem:[%s17] sm:$0xff] %v18
          %v20 = vld [vmem:[%s16 + $0x8] sm:$0xff]
          %21 = vst [vmem:[%s17 + $0x10] sm:$0xff] %v20
          %v22 = vld [vmem:[%s16 + $0x10] sm:$0xff]
          %23 = vst [vmem:[%s17 + $0x20] sm:$0xff] %v22
          %v24 = vld [vmem:[%s16 + $0x18] sm:$0xff]
          %25 = vst [vmem:[%s17 + $0x30] sm:$0xff] %v24
          %v26 = vld [vmem:[%s16 + $0x20] sm:$0xff]
          %27 = vst [vmem:[%s17 + $0x40] sm:$0xff] %v26
          %v28 = vld [vmem:[%s16 + $0x28] sm:$0xff]
          %29 = vst [vmem:[%s17 + $0x50] sm:$0xff] %v28
          %v30 = vld [vmem:[%s16 + $0x30] sm:$0xff]
          %31 = vst [vmem:[%s17 + $0x60] sm:$0xff] %v30
          %v32 = vld [vmem:[%s16 + $0x38] sm:$0xff]
          %33 = vst [vmem:[%s17 + $0x70] sm:$0xff] %v32
        $region18: #{reverse.1} parent=12 // loop_footer
          %s15 = sadd.s32 1, %s11
        $region19: #{reverse.1} parent=12 // loop_footer_branch
          %10 = sbr.rel target = $region15
        $region20: #{reverse.1} parent=12 // loop_exit
          _
      $region13: #{reverse.1} parent=4 // pred_fallthru
        _
    $region5: #{reverse.1} parent=1 // pred_fallthru
      _
    %62 = vnop
    %s63 = scalar_lea.vmem [#allocation0], 7
    %v64 = vld [vmem:[%s63] ss:$-1 sm:$0xff]
    %v65 = vrot.slane %v64, 1
    %66 = vst [vmem:[#allocation1] sm:$0xff] %v65
    %s67 = scalar_lea.vmem [#allocation0], 8
    %s68 = scalar_lea.vmem %s67, 7 [#allocation0]
    %v69 = vld [vmem:[%s68] ss:$-1 sm:$0xff]
    %v70 = vrot.slane %v69, 1
    %v71 = vlaneseq
    %v72 = vshrl.u32 %v71, 7
    %vm73 = vcmp.lt.s32.totalorder %v72, 7
    %74 = vst.msk [vmem:[#allocation1] sm:$0xff] %vm73, %v70
    %s75 = scalar_lea.vmem [#allocation1], 8
    %s76 = scalar_lea.vmem [#allocation0], 16
    %s77 = scalar_lea.vmem %s76, 7 [#allocation0]
    %v78 = vld [vmem:[%s77] ss:$-1 sm:$0xff]
    %v79 = vrot.slane %v78, 1
    %80 = vst [vmem:[%s75] sm:$0xff] %v79
    %s81 = scalar_lea.vmem %s76, 8 [#allocation0]
    %s82 = scalar_lea.vmem %s81, 7 [#allocation0]
    %v83 = vld [vmem:[%s82] ss:$-1 sm:$0xff]
    %v84 = vrot.slane %v83, 1
    %v85 = vlaneseq
    %v86 = vshrl.u32 %v85, 7
    %vm87 = vcmp.lt.s32.totalorder %v86, 7
    %88 = vst.msk [vmem:[%s75] sm:$0xff] %vm87, %v84
    %s89 = scalar_lea.vmem [#allocation1], 16
    %s90 = scalar_lea.vmem [#allocation0], 32
    %s91 = scalar_lea.vmem %s90, 7 [#allocation0]
    %v92 = vld [vmem:[%s91] ss:$-1 sm:$0xff]
    %v93 = vrot.slane %v92, 1
    %94 = vst [vmem:[%s89] sm:$0xff] %v93
    %s95 = scalar_lea.vmem %s90, 8 [#allocation0]
    %s96 = scalar_lea.vmem %s95, 7 [#allocation0]
    %v97 = vld [vmem:[%s96] ss:$-1 sm:$0xff]
    %v98 = vrot.slane %v97, 1
    %v99 = vlaneseq
    %v100 = vshrl.u32 %v99, 7
    %vm101 = vcmp.lt.s32.totalorder %v100, 7
    %102 = vst.msk [vmem:[%s89] sm:$0xff] %vm101, %v98
    %s103 = scalar_lea.vmem [#allocation1], 24
    %s104 = scalar_lea.vmem [#allocation0], 48
    %s105 = scalar_lea.vmem %s104, 7 [#allocation0]
    %v106 = vld [vmem:[%s105] ss:$-1 sm:$0xff]
    %v107 = vrot.slane %v106, 1
    %108 = vst [vmem:[%s103] sm:$0xff] %v107
    %s109 = scalar_lea.vmem %s104, 8 [#allocation0]
    %s110 = scalar_lea.vmem %s109, 7 [#allocation0]
    %v111 = vld [vmem:[%s110] ss:$-1 sm:$0xff]
    %v112 = vrot.slane %v111, 1
    %v113 = vlaneseq
    %v114 = vshrl.u32 %v113, 7
    %vm115 = vcmp.lt.s32.totalorder %v114, 7
    %116 = vst.msk [vmem:[%s103] sm:$0xff] %vm115, %v112
    %s117 = scalar_lea.vmem [#allocation1], 32
    %s118 = scalar_lea.vmem [#allocation0], 64
    %s119 = scalar_lea.vmem %s118, 7 [#allocation0]
    %v120 = vld [vmem:[%s119] ss:$-1 sm:$0xff]
    %v121 = vrot.slane %v120, 1
    %122 = vst [vmem:[%s117] sm:$0xff] %v121
    %s123 = scalar_lea.vmem %s118, 8 [#allocation0]
    %s124 = scalar_lea.vmem %s123, 7 [#allocation0]
    %v125 = vld [vmem:[%s124] ss:$-1 sm:$0xff]
    %v126 = vrot.slane %v125, 1
    %v127 = vlaneseq
    %v128 = vshrl.u32 %v127, 7
    %vm129 = vcmp.lt.s32.totalorder %v128, 7
    %130 = vst.msk [vmem:[%s117] sm:$0xff] %vm129, %v126
    %s131 = scalar_lea.vmem [#allocation1], 40
    %s132 = scalar_lea.vmem [#allocation0], 80
    %s133 = scalar_lea.vmem %s132, 7 [#allocation0]
    %v134 = vld [vmem:[%s133] ss:$-1 sm:$0xff]
    %v135 = vrot.slane %v134, 1
    %136 = vst [vmem:[%s131] sm:$0xff] %v135
    %s137 = scalar_lea.vmem %s132, 8 [#allocation0]
    %s138 = scalar_lea.vmem %s137, 7 [#allocation0]
    %v139 = vld [vmem:[%s138] ss:$-1 sm:$0xff]
    %v140 = vrot.slane %v139, 1
    %v141 = vlaneseq
    %v142 = vshrl.u32 %v141, 7
    %vm143 = vcmp.lt.s32.totalorder %v142, 7
    %144 = vst.msk [vmem:[%s131] sm:$0xff] %vm143, %v140
    %s145 = scalar_lea.vmem [#allocation1], 48
    %s146 = scalar_lea.vmem [#allocation0], 96
    %s147 = scalar_lea.vmem %s146, 7 [#allocation0]
    %v148 = vld [vmem:[%s147] ss:$-1 sm:$0xff]
    %v149 = vrot.slane %v148, 1
    %150 = vst [vmem:[%s145] sm:$0xff] %v149
    %s151 = scalar_lea.vmem %s146, 8 [#allocation0]
    %s152 = scalar_lea.vmem %s151, 7 [#allocation0]
    %v153 = vld [vmem:[%s152] ss:$-1 sm:$0xff]
    %v154 = vrot.slane %v153, 1
    %v155 = vlaneseq
    %v156 = vshrl.u32 %v155, 7
    %vm157 = vcmp.lt.s32.totalorder %v156, 7
    %158 = vst.msk [vmem:[%s145] sm:$0xff] %vm157, %v154
    %s159 = scalar_lea.vmem [#allocation1], 56
    %s160 = scalar_lea.vmem [#allocation0], 112
    %s161 = scalar_lea.vmem %s160, 7 [#allocation0]
    %v162 = vld [vmem:[%s161] ss:$-1 sm:$0xff]
    %v163 = vrot.slane %v162, 1
    %164 = vst [vmem:[%s159] sm:$0xff] %v163
    %s165 = scalar_lea.vmem %s160, 8 [#allocation0]
    %s166 = scalar_lea.vmem %s165, 7 [#allocation0]
    %v167 = vld [vmem:[%s166] ss:$-1 sm:$0xff]
    %v168 = vrot.slane %v167, 1
    %v169 = vlaneseq
    %v170 = vshrl.u32 %v169, 7
    %vm171 = vcmp.lt.s32.totalorder %v170, 7
    %172 = vst.msk [vmem:[%s159] sm:$0xff] %vm171, %v168
    // Predicated region
    $region36: #{reverse.1} parent=1 // pred_check
      _
    $region37: #{reverse.1} parent=1 // pred_check_branch
      %174 = sbr.rel (0) target = $region39
    $region38: #{reverse.1} parent=1 // pred_region
      // Predicated region
      $region40: #{reverse.1} parent=38 // pred_check
        _
      $region41: #{reverse.1} parent=38 // pred_check_branch
        %176 = sbr.rel (0) target = $region43
      $region42: #{reverse.1} parent=38 // pred_region
        // Predicated region
        $region55: #{reverse.1} parent=42 // pred_check
          _
        $region56: #{reverse.1} parent=42 // pred_check_branch
          %205 = sbr.rel (0) target = $region58
        $region57: #{reverse.1} parent=42 // pred_region
          loop: start=0, step=1, limit=1
          $region59: #{reverse.1} parent=57 // loop_pre_header
            _
          $region60: #{reverse.1} parent=57 // loop_header
            %s207 = sphi 0, %s211
            %p208 = scmp.ge.s32.totalorder %s207, 1
            %s212 = sphi [#allocation1], [#allocation1]
            %s213 = sphi %s1, %s1
          $region61: #{reverse.1} parent=57 // loop_header_branch
            %210 = sbr.rel (%p208) target = $region65
          $region62: #{reverse.1} parent=57 // loop_body
            %v214 = vld [vmem:[%s212] sm:$0xff]
            %215 = vst [vmem:[%s213] sm:$0xff] %v214
            %v216 = vld [vmem:[%s212 + $0x8] sm:$0xff]
            %217 = vst [vmem:[%s213 + $0x8] sm:$0xff] %v216
            %v218 = vld [vmem:[%s212 + $0x10] sm:$0xff]
            %219 = vst [vmem:[%s213 + $0x10] sm:$0xff] %v218
            %v220 = vld [vmem:[%s212 + $0x18] sm:$0xff]
            %221 = vst [vmem:[%s213 + $0x18] sm:$0xff] %v220
            %v222 = vld [vmem:[%s212 + $0x20] sm:$0xff]
            %223 = vst [vmem:[%s213 + $0x20] sm:$0xff] %v222
            %v224 = vld [vmem:[%s212 + $0x28] sm:$0xff]
            %225 = vst [vmem:[%s213 + $0x28] sm:$0xff] %v224
            %v226 = vld [vmem:[%s212 + $0x30] sm:$0xff]
            %227 = vst [vmem:[%s213 + $0x30] sm:$0xff] %v226
            %v228 = vld [vmem:[%s212 + $0x38] sm:$0xff]
            %229 = vst [vmem:[%s213 + $0x38] sm:$0xff] %v228
          $region63: #{reverse.1} parent=57 // loop_footer
            %s211 = sadd.s32 1, %s207
          $region64: #{reverse.1} parent=57 // loop_footer_branch
            %206 = sbr.rel target = $region60
          $region65: #{reverse.1} parent=57 // loop_exit
            _
        $region58: #{reverse.1} parent=42 // pred_fallthru
          _
        // Predicated region
        $region66: #{reverse.1} parent=42 // pred_check
          _
        $region67: #{reverse.1} parent=42 // pred_check_branch
          %231 = sbr.rel target = $region69
        $region68: #{reverse.1} parent=42 // pred_region
          _
        $region69: #{reverse.1} parent=42 // pred_fallthru
          _
      $region43: #{reverse.1} parent=38 // pred_fallthru
        _
      // Predicated region
      $region44: #{reverse.1} parent=38 // pred_check
        _
      $region45: #{reverse.1} parent=38 // pred_check_branch
        %178 = sbr.rel target = $region47
      $region46: #{reverse.1} parent=38 // pred_region
        loop: start=0, step=1, limit=1
        $region48: #{reverse.1} parent=46 // loop_pre_header
          _
        $region49: #{reverse.1} parent=46 // loop_header
          %s181 = sphi 0, %s185
          %p182 = scmp.ge.s32.totalorder %s181, 1
          %s186 = sphi [#allocation1], [#allocation1]
          %s187 = sphi %s1, %s1
        $region50: #{reverse.1} parent=46 // loop_header_branch
          %184 = sbr.rel (%p182) target = $region54
        $region51: #{reverse.1} parent=46 // loop_body
          %v188 = vld [vmem:[%s186] sm:$0xff]
          %189 = vst [vmem:[%s187] sm:$0xff] %v188
          %v190 = vld [vmem:[%s186 + $0x8] sm:$0xff]
          %191 = vst [vmem:[%s187 + $0x8] sm:$0xff] %v190
          %v192 = vld [vmem:[%s186 + $0x10] sm:$0xff]
          %193 = vst [vmem:[%s187 + $0x10] sm:$0xff] %v192
          %v194 = vld [vmem:[%s186 + $0x18] sm:$0xff]
          %195 = vst [vmem:[%s187 + $0x18] sm:$0xff] %v194
          %v196 = vld [vmem:[%s186 + $0x20] sm:$0xff]
          %197 = vst [vmem:[%s187 + $0x20] sm:$0xff] %v196
          %v198 = vld [vmem:[%s186 + $0x28] sm:$0xff]
          %199 = vst [vmem:[%s187 + $0x28] sm:$0xff] %v198
          %v200 = vld [vmem:[%s186 + $0x30] sm:$0xff]
          %201 = vst [vmem:[%s187 + $0x30] sm:$0xff] %v200
          %v202 = vld [vmem:[%s186 + $0x38] sm:$0xff]
          %203 = vst [vmem:[%s187 + $0x38] sm:$0xff] %v202
        $region52: #{reverse.1} parent=46 // loop_footer
          %s185 = sadd.s32 1, %s181
        $region53: #{reverse.1} parent=46 // loop_footer_branch
          %180 = sbr.rel target = $region49
        $region54: #{reverse.1} parent=46 // loop_exit
          _
      $region47: #{reverse.1} parent=38 // pred_fallthru
        _
    $region39: #{reverse.1} parent=1 // pred_fallthru
      _
    %232 = vnop

// kernel: spectral_conv2d.1
$region0: #{spectral_conv2d.1}
  #allocation0 [shape = 'u32[]', space=smem, size = 0x4, offset = 0x4, fixed_abs, tag = 'smem constant byte address 0x4 - core index']
  #allocation1 [shape = 'u32[144,128]{1,0:T(1,128)}', space=vmem, size = 0x12000, scoped, tag = 'internal scratch']
  %s0 = inlined_call_operand.vmem [shape: f32[2,8,128], index: 0, kind: input, shape index: {}]
  %s1 = inlined_call_operand.vmem [shape: f32[2,16,128], index: 1, kind: input, shape index: {}]
  %s2 = inlined_call_operand.vmem [shape: f32[2,8,128], index: 2, kind: output, shape index: {}]
  %s3 = sld [smem:[#allocation0]]
  $region18: #{spectral_conv2d.1} parent=0
    _
  %s5 = ssub.s32 1, %s3
  %s6 = scalar_select 0, %s5, %s3
  // Predicated region
  $region2: #{spectral_conv2d.1} parent=0 // pred_check
    _
  $region3: #{spectral_conv2d.1} parent=0 // pred_check_branch
    %8 = sbr.rel (0) target = $region5
  $region4: #{spectral_conv2d.1} parent=0 // pred_region
    _
  $region5: #{spectral_conv2d.1} parent=0 // pred_fallthru
    _
  // Predicated region
  $region6: #{spectral_conv2d.1} parent=0 // pred_check
    _
  $region7: #{spectral_conv2d.1} parent=0 // pred_check_branch
    %10 = sbr.rel (0) target = $region9
  $region8: #{spectral_conv2d.1} parent=0 // pred_region
    _
  $region9: #{spectral_conv2d.1} parent=0 // pred_fallthru
    _
  %v11 = vld [vmem:[%s1] sm:$0xf]
  %s12 = scalar_lea.vmem %s1, 16
  %v13 = vld [vmem:[%s12] sm:$0xf]
  %v14 = vld [vmem:[%s0] sm:$0x1]
  %v15 = vlaneseq
  %v16 = vshrl.u32 %v15, 7
  %v17 = vsub.s32 0, %v16
  %v18 = vrot.slane %v14, %v17
  %s19 = scalar_lea.vmem %s0, 8
  %v20 = vld [vmem:[%s19] sm:$0x1]
  %v21 = vlaneseq
  %v22 = vshrl.u32 %v21, 7
  %v23 = vsub.s32 0, %v22
  %v24 = vrot.slane %v20, %v23
  %v25 = vmul.f32 %v18, %v11
  %v26 = vmul.f32 %v24, %v13
  %v27 = vsub.f32 %v25, %v26
  %v28 = vmul.f32 %v18, %v13
  %v29 = vmul.f32 %v24, %v11
  %v30 = vadd.f32 %v28, %v29
  %v31 = vld [vmem:[%s0 + $0x4] sm:$0x1]
  %v32 = vlaneseq
  %v33 = vshrl.u32 %v32, 7
  %v34 = vsub.s32 0, %v33
  %v35 = vrot.slane %v31, %v34
  %v36 = vld [vmem:[%s19 + $0x4] sm:$0x1]
  %v37 = vlaneseq
  %v38 = vshrl.u32 %v37, 7
  %v39 = vsub.s32 0, %v38
  %v40 = vrot.slane %v36, %v39
  %v41 = vmul.f32 %v35, %v11
  %v42 = vmul.f32 %v40, %v13
  %v43 = vsub.f32 %v41, %v42
  %v44 = vmul.f32 %v35, %v13
  %v45 = vmul.f32 %v40, %v11
  %v46 = vadd.f32 %v44, %v45
  %v47 = vld [vmem:[%s1 + $0x4] sm:$0xf]
  %v48 = vld [vmem:[%s12 + $0x4] sm:$0xf]
  %v49 = vld [vmem:[%s0 + $0x1] sm:$0x1]
  %v50 = vlaneseq
  %v51 = vshrl.u32 %v50, 7
  %v52 = vsub.s32 0, %v51
  %v53 = vrot.slane %v49, %v52
  %v54 = vld [vmem:[%s19 + $0x1] sm:$0x1]
  %v55 = vlaneseq
  %v56 = vshrl.u32 %v55, 7
  %v57 = vsub.s32 0, %v56
  %v58 = vrot.slane %v54, %v57
  %v59 = vmul.f32 %v53, %v47
  %v60 = vmul.f32 %v58, %v48
  %v61 = vsub.f32 %v59, %v60
  %v62 = vmul.f32 %v53, %v48
  %v63 = vmul.f32 %v58, %v47
  %v64 = vadd.f32 %v62, %v63
  %v65 = vadd.f32 %v27, %v61
  %v66 = vadd.f32 %v30, %v64
  %v67 = vld [vmem:[%s0 + $0x5] sm:$0x1]
  %v68 = vlaneseq
  %v69 = vshrl.u32 %v68, 7
  %v70 = vsub.s32 0, %v69
  %v71 = vrot.slane %v67, %v70
  %v72 = vld [vmem:[%s19 + $0x5] sm:$0x1]
  %v73 = vlaneseq
  %v74 = vshrl.u32 %v73, 7
  %v75 = vsub.s32 0, %v74
  %v76 = vrot.slane %v72, %v75
  %v77 = vmul.f32 %v71, %v47
  %v78 = vmul.f32 %v76, %v48
  %v79 = vsub.f32 %v77, %v78
  %v80 = vmul.f32 %v71, %v48
  %v81 = vmul.f32 %v76, %v47
  %v82 = vadd.f32 %v80, %v81
  %v83 = vadd.f32 %v43, %v79
  %v84 = vadd.f32 %v46, %v82
  %v85 = vld [vmem:[%s1 + $0x8] sm:$0xf]
  %v86 = vld [vmem:[%s12 + $0x8] sm:$0xf]
  %v87 = vld [vmem:[%s0 + $0x2] sm:$0x1]
  %v88 = vlaneseq
  %v89 = vshrl.u32 %v88, 7
  %v90 = vsub.s32 0, %v89
  %v91 = vrot.slane %v87, %v90
  %v92 = vld [vmem:[%s19 + $0x2] sm:$0x1]
  %v93 = vlaneseq
  %v94 = vshrl.u32 %v93, 7
  %v95 = vsub.s32 0, %v94
  %v96 = vrot.slane %v92, %v95
  %v97 = vmul.f32 %v91, %v85
  %v98 = vmul.f32 %v96, %v86
  %v99 = vsub.f32 %v97, %v98
  %v100 = vmul.f32 %v91, %v86
  %v101 = vmul.f32 %v96, %v85
  %v102 = vadd.f32 %v100, %v101
  %v103 = vadd.f32 %v65, %v99
  %v104 = vadd.f32 %v66, %v102
  %v105 = vld [vmem:[%s0 + $0x6] sm:$0x1]
  %v106 = vlaneseq
  %v107 = vshrl.u32 %v106, 7
  %v108 = vsub.s32 0, %v107
  %v109 = vrot.slane %v105, %v108
  %v110 = vld [vmem:[%s19 + $0x6] sm:$0x1]
  %v111 = vlaneseq
  %v112 = vshrl.u32 %v111, 7
  %v113 = vsub.s32 0, %v112
  %v114 = vrot.slane %v110, %v113
  %v115 = vmul.f32 %v109, %v85
  %v116 = vmul.f32 %v114, %v86
  %v117 = vsub.f32 %v115, %v116
  %v118 = vmul.f32 %v109, %v86
  %v119 = vmul.f32 %v114, %v85
  %v120 = vadd.f32 %v118, %v119
  %v121 = vadd.f32 %v83, %v117
  %v122 = vadd.f32 %v84, %v120
  %v123 = vld [vmem:[%s1 + $0xc] sm:$0xf]
  %v124 = vld [vmem:[%s12 + $0xc] sm:$0xf]
  %v125 = vld [vmem:[%s0 + $0x3] sm:$0x1]
  %v126 = vlaneseq
  %v127 = vshrl.u32 %v126, 7
  %v128 = vsub.s32 0, %v127
  %v129 = vrot.slane %v125, %v128
  %v130 = vld [vmem:[%s19 + $0x3] sm:$0x1]
  %v131 = vlaneseq
  %v132 = vshrl.u32 %v131, 7
  %v133 = vsub.s32 0, %v132
  %v134 = vrot.slane %v130, %v133
  %v135 = vmul.f32 %v129, %v123
  %v136 = vmul.f32 %v134, %v124
  %v137 = vsub.f32 %v135, %v136
  %v138 = vmul.f32 %v129, %v124
  %v139 = vmul.f32 %v134, %v123
  %v140 = vadd.f32 %v138, %v139
  %v141 = vadd.f32 %v103, %v137
  %v142 = vadd.f32 %v104, %v140
  %v143 = vld [vmem:[%s0 + $0x7] sm:$0x1]
  %v144 = vlaneseq
  %v145 = vshrl.u32 %v144, 7
  %v146 = vsub.s32 0, %v145
  %v147 = vrot.slane %v143, %v146
  %v148 = vld [vmem:[%s19 + $0x7] sm:$0x1]
  %v149 = vlaneseq
  %v150 = vshrl.u32 %v149, 7
  %v151 = vsub.s32 0, %v150
  %v152 = vrot.slane %v148, %v151
  %v153 = vmul.f32 %v147, %v123
  %v154 = vmul.f32 %v152, %v124
  %v155 = vsub.f32 %v153, %v154
  %v156 = vmul.f32 %v147, %v124
  %v157 = vmul.f32 %v152, %v123
  %v158 = vadd.f32 %v156, %v157
  %v159 = vadd.f32 %v121, %v155
  %v160 = vadd.f32 %v122, %v158
  %v162 = vrot.slane %v159, 4
  %vm164 = vcmask 1043456
  %v165 = vsel %vm164, %v141, %v162
  %166 = vst [vmem:[%s2] sm:$0xff] %v165
  %v168 = vrot.slane %v160, 4
  %v170 = vsel %vm164, %v142, %v168
  %s171 = scalar_lea.vmem %s2, 8
  %172 = vst [vmem:[%s171] sm:$0xff] %v170
  // Predicated region
  $region10: #{spectral_conv2d.1} parent=0 // pred_check
    _
  $region11: #{spectral_conv2d.1} parent=0 // pred_check_branch
    %174 = sbr.rel (0) target = $region13
  $region12: #{spectral_conv2d.1} parent=0 // pred_region
    _
  $region13: #{spectral_conv2d.1} parent=0 // pred_fallthru
    _
  // Predicated region
  $region14: #{spectral_conv2d.1} parent=0 // pred_check
    _
  $region15: #{spectral_conv2d.1} parent=0 // pred_check_branch
    %176 = sbr.rel (0) target = $region17
  $region16: #{spectral_conv2d.1} parent=0 // pred_region
    _
  $region17: #{spectral_conv2d.1} parent=0 // pred_fallthru
    _

</llo_original>
